<compile_context>
chip_gen: v7x
topology: tpu7x:2x2x1
jax: 0.10.0
libtpu: 0.0.40
codegen_flags: <defaults>
</compile_context>

<pallas_src>
import jax
import jax.numpy as jnp
from jax.experimental import pallas as pl
from jax.experimental.pallas import tpu as pltpu


def _round_up(n, m):
    return ((n + m - 1) // m) * m


def mlp_kernel(x_ref, w1_ref, b1_ref, w2_ref, b2_ref, o_ref):
    # Linear(100, 100): (TB,100) x (100,100) on the MXU, f32 accumulation.
    h = jnp.dot(x_ref[...], w1_ref[...], preferred_element_type=jnp.float32)
    # Bias + ReLU (PyTorch's inplace ReLU is just an elementwise max here).
    h = jnp.maximum(h + b1_ref[...], 0.0)
    # Linear(100, 10): narrow-N matmul; result stored 10-wide.
    y = jnp.dot(h, w2_ref[...], preferred_element_type=jnp.float32)
    o_ref[...] = (y + b2_ref[...]).astype(o_ref.dtype)


def _choose_tile(b_pad):
    # Prefer >= 2 grid steps when the batch allows it (v7x shards the
    # "parallel" batch axis across its 2 TensorCores), cap tiles at 1024 rows.
    # VMEM stays ~1 MiB for any B, well under every generation's budget.
    if b_pad <= 8:
        return b_pad
    return min(1024, _round_up(pl.cdiv(b_pad, 2), 8))


@jax.jit
def simple_module_forward(x, w1, b1, w2, b2):
    """x: (B, 100) f32; w1: (100,100) (in,out); b1: (1,100); w2: (100,10); b2: (1,10)."""
    B, d_in = x.shape
    d_hidden = w1.shape[1]
    d_out = w2.shape[1]

    # Pad the batch only to the sublane multiple (<= 7 extra rows); padded rows
    # are sliced away at the end.  Feature dims stay at their natural sizes.
    B_pad = _round_up(B, 8)
    x_in = jnp.pad(x, ((0, B_pad - B), (0, 0))) if B_pad != B else x

    TB = _choose_tile(B_pad)
    grid = (pl.cdiv(B_pad, TB),)

    flops = 2 * B_pad * (d_in * d_hidden + d_hidden * d_out)
    bytes_accessed = 4 * (B_pad * d_in + d_in * d_hidden + d_hidden
                          + d_hidden * d_out + d_out + B_pad * d_out)

    out = pl.pallas_call(
        mlp_kernel,
        out_shape=jax.ShapeDtypeStruct((B_pad, d_out), jnp.float32),
        grid=grid,
        in_specs=[
            # x: streamed per batch tile; last block dim == full array dim (100).
            pl.BlockSpec((TB, d_in), lambda i: (i, 0)),
            # Weights/biases: constant index_map -> DMA'd once, VMEM-resident.
            pl.BlockSpec((d_in, d_hidden), lambda i: (0, 0)),
            pl.BlockSpec((1, d_hidden), lambda i: (0, 0)),
            pl.BlockSpec((d_hidden, d_out), lambda i: (0, 0)),
            pl.BlockSpec((1, d_out), lambda i: (0, 0)),
        ],
        # Output written 10-wide directly; block dims equal full array dims.
        out_specs=pl.BlockSpec((TB, d_out), lambda i: (i, 0)),
        compiler_params=pltpu.CompilerParams(
            dimension_semantics=("parallel",),  # shard batch tiles across TCs (v7x)
        ),
        cost_estimate=pl.CostEstimate(
            flops=flops, bytes_accessed=bytes_accessed, transcendentals=0),
    )(x_in, w1, b1, w2, b2)

    # Drop sublane padding rows (no feature-dim slice needed anymore).
    return out[:B] if B_pad != B else out


def init_params(key):
    """Deterministic init mimicking torch.nn.Linear's uniform(-1/sqrt(fan_in), ...).

    Weights stored pre-transposed as (in_features, out_features); biases 2-D.
    """
    k1, k2, k3, k4 = jax.random.split(key, 4)
    bound1 = 1.0 / jnp.sqrt(100.0)
    w1 = jax.random.uniform(k1, (100, 100), jnp.float32, -bound1, bound1)
    b1 = jax.random.uniform(k2, (1, 100), jnp.float32, -bound1, bound1)
    bound2 = 1.0 / jnp.sqrt(100.0)
    w2 = jax.random.uniform(k3, (100, 10), jnp.float32, -bound2, bound2)
    b2 = jax.random.uniform(k4, (1, 10), jnp.float32, -bound2, bound2)
    return w1, b1, w2, b2


if __name__ == "__main__":
    key = jax.random.PRNGKey(0)
    kx, kp = jax.random.split(key)
    B = 8  # small test batch; kernel tiles/scales to arbitrary B
    x = jax.random.normal(kx, (B, 100), jnp.float32)
    w1, b1, w2, b2 = init_params(kp)

    out = simple_module_forward(x, w1, b1, w2, b2)
    out = jax.block_until_ready(out)

    # Pure-JAX reference check (unpadded math).
    ref = jnp.maximum(x @ w1 + b1, 0.0) @ w2 + b2
    assert out.shape == (B, 10)
    assert jnp.allclose(out, ref, atol=1e-5, rtol=1e-5), "mismatch vs reference"
    print("KERNEL_OK")
</pallas_src>

<mosaic_0001>
module attributes {stable_mosaic.version = 11 : i64} {
  func.func @mlp_kernel(%arg0: i32, %arg1: memref<8x100xf32, #tpu.memory_space<vmem>>, %arg2: memref<100x100xf32, #tpu.memory_space<vmem>>, %arg3: memref<1x100xf32, #tpu.memory_space<vmem>>, %arg4: memref<100x10xf32, #tpu.memory_space<vmem>>, %arg5: memref<1x10xf32, #tpu.memory_space<vmem>>, %arg6: memref<8x10xf32, #tpu.memory_space<vmem>>) attributes {dimension_semantics = [#tpu.dimension_semantics<parallel>], iteration_bounds = array<i64: 1>, scalar_prefetch = 0 : i64, scratch_operands = 0 : i64, tpu.core_type = #tpu.core_type<tc>, window_params = [{transform_indices = @transform_0, window_bounds = array<i64: 8, 100>}, {pipeline_mode = #tpu.pipeline_mode<synchronous>, transform_indices = @transform_1, window_bounds = array<i64: 100, 100>}, {pipeline_mode = #tpu.pipeline_mode<synchronous>, transform_indices = @transform_2, window_bounds = array<i64: 1, 100>}, {pipeline_mode = #tpu.pipeline_mode<synchronous>, transform_indices = @transform_3, window_bounds = array<i64: 100, 10>}, {pipeline_mode = #tpu.pipeline_mode<synchronous>, transform_indices = @transform_4, window_bounds = array<i64: 1, 10>}, {transform_indices = @transform_5, window_bounds = array<i64: 8, 10>}]} {
    %c0 = arith.constant 0 : index
    %c0_0 = arith.constant 0 : index
    %0 = vector.load %arg1[%c0, %c0_0] : memref<8x100xf32, #tpu.memory_space<vmem>>, vector<8x100xf32>
    %c0_1 = arith.constant 0 : index
    %c0_2 = arith.constant 0 : index
    %1 = vector.load %arg2[%c0_1, %c0_2] : memref<100x100xf32, #tpu.memory_space<vmem>>, vector<100x100xf32>
    %cst = arith.constant dense<0.000000e+00> : vector<8x100xf32>
    %2 = tpu.matmul %0, %1, %cst {dimension_numbers = #tpu.dot_dimension_numbers<[1], [0], [0], [1], [0, 0, 1, 1], [], []>} : vector<8x100xf32>, vector<100x100xf32>, vector<8x100xf32> -> vector<8x100xf32>
    %c0_3 = arith.constant 0 : index
    %c0_4 = arith.constant 0 : index
    %3 = vector.load %arg3[%c0_3, %c0_4] : memref<1x100xf32, #tpu.memory_space<vmem>>, vector<1x100xf32>
    %4 = vector.broadcast %3 : vector<1x100xf32> to vector<8x100xf32>
    %5 = arith.addf %2, %4 : vector<8x100xf32>
    %cst_5 = arith.constant 0.000000e+00 : f32
    %6 = vector.broadcast %cst_5 : f32 to vector<8x100xf32>
    %7 = arith.maximumf %5, %6 : vector<8x100xf32>
    %c0_6 = arith.constant 0 : index
    %c0_7 = arith.constant 0 : index
    %8 = vector.load %arg4[%c0_6, %c0_7] : memref<100x10xf32, #tpu.memory_space<vmem>>, vector<100x10xf32>
    %cst_8 = arith.constant dense<0.000000e+00> : vector<8x10xf32>
    %9 = tpu.matmul %7, %8, %cst_8 {dimension_numbers = #tpu.dot_dimension_numbers<[1], [0], [0], [1], [0, 0, 1, 1], [], []>} : vector<8x100xf32>, vector<100x10xf32>, vector<8x10xf32> -> vector<8x10xf32>
    %c0_9 = arith.constant 0 : index
    %c0_10 = arith.constant 0 : index
    %10 = vector.load %arg5[%c0_9, %c0_10] : memref<1x10xf32, #tpu.memory_space<vmem>>, vector<1x10xf32>
    %11 = vector.broadcast %10 : vector<1x10xf32> to vector<8x10xf32>
    %12 = arith.addf %9, %11 : vector<8x10xf32>
    %c0_11 = arith.constant 0 : index
    %c0_12 = arith.constant 0 : index
    %13 = vector.load %arg6[%c0_11, %c0_12] : memref<8x10xf32, #tpu.memory_space<vmem>>, vector<8x10xf32>
    tpu.vector_store %arg6[%c0_11, %c0_12], %12 {strides = array<i32>} : memref<8x10xf32, #tpu.memory_space<vmem>>, vector<8x10xf32>,
    return
  }
  func.func @transform_0(%arg0: i32) -> (i32, i32) {
    %c0_i32 = arith.constant 0 : i32
    %c0_i32_0 = arith.constant 0 : i32
    return %arg0, %c0_i32 : i32, i32
  }
  func.func @transform_1(%arg0: i32) -> (i32, i32) {
    %c0_i32 = arith.constant 0 : i32
    %c0_i32_0 = arith.constant 0 : i32
    %c0_i32_1 = arith.constant 0 : i32
    return %c0_i32, %c0_i32_0 : i32, i32
  }
  func.func @transform_2(%arg0: i32) -> (i32, i32) {
    %c0_i32 = arith.constant 0 : i32
    %c0_i32_0 = arith.constant 0 : i32
    %c0_i32_1 = arith.constant 0 : i32
    return %c0_i32, %c0_i32_0 : i32, i32
  }
  func.func @transform_3(%arg0: i32) -> (i32, i32) {
    %c0_i32 = arith.constant 0 : i32
    %c0_i32_0 = arith.constant 0 : i32
    %c0_i32_1 = arith.constant 0 : i32
    return %c0_i32, %c0_i32_0 : i32, i32
  }
  func.func @transform_4(%arg0: i32) -> (i32, i32) {
    %c0_i32 = arith.constant 0 : i32
    %c0_i32_0 = arith.constant 0 : i32
    %c0_i32_1 = arith.constant 0 : i32
    return %c0_i32, %c0_i32_0 : i32, i32
  }
  func.func @transform_5(%arg0: i32) -> (i32, i32) {
    %c0_i32 = arith.constant 0 : i32
    %c0_i32_0 = arith.constant 0 : i32
    return %arg0, %c0_i32 : i32, i32
  }
}

</mosaic_0001>

<llo_original>
// kernel: simple_module_forward.1
$region0: #{simple_module_forward.1}
  #allocation0 [shape = 'u32[]', space=smem, size = 0x4, offset = 0x4, fixed_abs, tag = 'smem constant byte address 0x4 - core index']
  #allocation1 [shape = 'u32[144,128]{1,0:T(1,128)}', space=vmem, size = 0x12000, scoped, tag = 'internal scratch']
  %s0 = inlined_call_operand.vmem [shape: f32[8,100], index: 0, kind: input, shape index: {}]
  %s1 = inlined_call_operand.vmem [shape: f32[100,100], index: 1, kind: input, shape index: {}]
  %s2 = inlined_call_operand.vmem [shape: f32[1,100], index: 2, kind: input, shape index: {}]
  %s3 = inlined_call_operand.vmem [shape: f32[100,10], index: 3, kind: input, shape index: {}]
  %s4 = inlined_call_operand.vmem [shape: f32[1,10], index: 4, kind: input, shape index: {}]
  %s5 = inlined_call_operand.hbm [shape: f32[8,10], index: 5, kind: output, shape index: {}]
  %s6 = sld [smem:[#allocation0]]
  $region30: #{simple_module_forward.1} parent=0
    _
  %s8 = ssub.s32 1, %s6
  %s9 = scalar_select 0, %s8, %s6
  $region1: #{simple_module_forward.1} parent=0
    #allocation2 [shape = 'u8[4096]{0}', space=vmem, size = 0x1000, scoped, tag = 'output window, operand 0, single buffered']
    #allocation3 [shape = 's32[1]{0}', space=sflag, size = 0x4, scoped, tag = 'scoped memory for simple_module_forward.1']
    %10 = vsyncpa [#allocation3], 0
    // Predicated region
    $region2: #{simple_module_forward.1} parent=1 // pred_check
      _
    $region3: #{simple_module_forward.1} parent=1 // pred_check_branch
      %12 = sbr.rel (0) target = $region5
    $region4: #{simple_module_forward.1} parent=1 // pred_region
      _
    $region5: #{simple_module_forward.1} parent=1 // pred_fallthru
      _
    // Predicated region
    $region6: #{simple_module_forward.1} parent=1 // pred_check
      _
    $region7: #{simple_module_forward.1} parent=1 // pred_check_branch
      %14 = sbr.rel (0) target = $region9
    $region8: #{simple_module_forward.1} parent=1 // pred_region
      _
    $region9: #{simple_module_forward.1} parent=1 // pred_fallthru
      _
    // Predicated region
    $region10: #{simple_module_forward.1} parent=1 // pred_check
      _
    $region11: #{simple_module_forward.1} parent=1 // pred_check_branch
      %16 = sbr.rel (0) target = $region13
    $region12: #{simple_module_forward.1} parent=1 // pred_region
      _
    $region13: #{simple_module_forward.1} parent=1 // pred_fallthru
      _
    // Predicated region
    $region14: #{simple_module_forward.1} parent=1 // pred_check
      _
    $region15: #{simple_module_forward.1} parent=1 // pred_check_branch
      %18 = sbr.rel (0) target = $region17
    $region16: #{simple_module_forward.1} parent=1 // pred_region
      _
    $region17: #{simple_module_forward.1} parent=1 // pred_fallthru
      _
    // Predicated region
    $region18: #{simple_module_forward.1} parent=1 // pred_check
      _
    $region19: #{simple_module_forward.1} parent=1 // pred_check_branch
      %20 = sbr.rel (0) target = $region21
    $region20: #{simple_module_forward.1} parent=1 // pred_region
      _
    $region21: #{simple_module_forward.1} parent=1 // pred_fallthru
      _
    %v21 = vld [vmem:[%s0] sm:$0xff]
    %v22 = vld [vmem:[%s1] sm:$0xff]
    %v23 = vld [vmem:[%s1 + $0x8] sm:$0xff]
    %v24 = vld [vmem:[%s1 + $0x10] sm:$0xff]
    %v25 = vld [vmem:[%s1 + $0x18] sm:$0xff]
    %v26 = vld [vmem:[%s1 + $0x20] sm:$0xff]
    %v27 = vld [vmem:[%s1 + $0x28] sm:$0xff]
    %v28 = vld [vmem:[%s1 + $0x30] sm:$0xff]
    %v29 = vld [vmem:[%s1 + $0x38] sm:$0xff]
    %v30 = vld [vmem:[%s1 + $0x40] sm:$0xff]
    %v31 = vld [vmem:[%s1 + $0x48] sm:$0xff]
    %v32 = vld [vmem:[%s1 + $0x50] sm:$0xff]
    %v33 = vld [vmem:[%s1 + $0x58] sm:$0xff]
    %v34 = vld [vmem:[%s1 + $0x60] sm:$0xf]
    %v35 = vld [vmem:[%s2] sm:$0x1]
    %v37 = vlaneseq
    %v38 = vshrl.u32 %v37, 7
    %v39 = vsub.s32 0, %v38
    %v40 = vrot.slane %v35, %v39
    %vm42 = vcmask 818176
    %v44 = vsel %vm42, %v21, 0
    %vm46 = vcmask 1043456
    %v48 = vsel %vm46, %v34, 0
    %50 = vmatprep.subr.mxu0 0.0
    %51 = vmatpush1.msra.mxu0 %v22
    %52 = vmatprep.subr.mxu0 0.0
    %53 = vmatpush1.msra.mxu0 %v23
    %54 = vmatprep.subr.mxu0 0.0
    %55 = vmatpush1.msra.mxu0 %v24
    %56 = vmatprep.subr.mxu0 0.0
    %57 = vmatpush1.msra.mxu0 %v25
    %58 = vmatprep.subr.mxu0 0.0
    %59 = vmatpush1.msra.mxu0 %v26
    %60 = vmatprep.subr.mxu0 0.0
    %61 = vmatpush1.msra.mxu0 %v27
    %62 = vmatprep.subr.mxu0 0.0
    %63 = vmatpush1.msra.mxu0 %v28
    %64 = vmatprep.subr.mxu0 0.0
    %65 = vmatpush1.msra.mxu0 %v29
    %66 = vmatprep.subr.mxu0 0.0
    %67 = vmatpush1.msra.mxu0 %v30
    %68 = vmatprep.subr.mxu0 0.0
    %69 = vmatpush1.msra.mxu0 %v31
    %70 = vmatprep.subr.mxu0 0.0
    %71 = vmatpush1.msra.mxu0 %v32
    %72 = vmatprep.subr.mxu0 0.0
    %73 = vmatpush1.msra.mxu0 %v33
    %74 = vmatprep.subr.mxu0 0.0
    %75 = vmatpush1.msra.mxu0 %v48
    %76 = vmatprep.subr.mxu0 0.0
    %77 = vmatpush1.msra.mxu0 0.0
    %78 = vmatprep.subr.mxu0 0.0
    %79 = vmatpush1.msra.mxu0 0.0
    %80 = vmatprep.subr.mxu0 0.0
    %81 = vmatpush1.msra.mxu0 0.0
    %82 = vmatprep.subr.mxu0 0.0
    %83 = vmatpush1.msra.mxu0 0.0
    %84 = vmatprep.subr.mxu0 0.0
    %85 = vmatpush1.msra.mxu0 0.0
    %86 = vmatprep.subr.mxu0 0.0
    %87 = vmatpush1.msra.mxu0 0.0
    %88 = vmatprep.subr.mxu0 0.0
    %89 = vmatpush1.msra.mxu0 0.0
    %90 = vmatprep.subr.mxu0 0.0
    %91 = vmatpush1.msra.mxu0 0.0
    %92 = vmatprep.subr.mxu0 0.0
    %93 = vmatpush1.msra.mxu0 0.0
    %94 = vmatprep.subr.mxu0 0.0
    %95 = vmatpush1.msra.mxu0 0.0
    %96 = vmatprep.subr.mxu0 0.0
    %97 = vmatpush1.msra.mxu0 0.0
    %98 = vmatprep.subr.mxu0 0.0
    %99 = vmatpush1.msra.mxu0 0.0
    %100 = vmatprep.subr.mxu0 0.0
    %101 = vmatpush1.msra.mxu0 0.0
    %102 = vmatprep.subr.mxu0 0.0
    %103 = vmatpush1.msra.mxu0 0.0
    %104 = vmatprep.subr.mxu0 0.0
    %105 = vmatpush1.msra.mxu0 0.0
    %106 = vmatprep.subr.mxu0 0.0
    %107 = vmatpush1.msra.mxu0 0.0
    %108 = vmatprep.subr.mxu0 0.0
    %109 = vmatpush1.msra.mxu0 0.0
    %110 = vmatprep.subr.mxu0 0.0
    %111 = vmatpush1.msra.mxu0 0.0
    %112 = vmatprep.subr.mxu0 0.0
    %113 = vmatpush1.msra.mxu0 0.0
    %114 = vmatprep.mubr.f32.mxu0 0.0
    %115 = vmatmul.mubr.f32.gmra.mrb[0].mxu0 %v44
    %v116 = vpop.f32.mrb[0].mxu0
    %v117 = vadd.f32 %v40, %v116
    %v118 = vpop.f32.mrb[0].mxu0
    %119 = vdwg.mxu0
    %v120 = vmax.f32 %v117, 0.0
    %v121 = vld [vmem:[%s3] sm:$0xff]
    %v122 = vld [vmem:[%s3 + $0x8] sm:$0xff]
    %v123 = vld [vmem:[%s3 + $0x10] sm:$0xff]
    %v124 = vld [vmem:[%s3 + $0x18] sm:$0xff]
    %v125 = vld [vmem:[%s3 + $0x20] sm:$0xff]
    %v126 = vld [vmem:[%s3 + $0x28] sm:$0xff]
    %v127 = vld [vmem:[%s3 + $0x30] sm:$0xff]
    %v128 = vld [vmem:[%s3 + $0x38] sm:$0xff]
    %v129 = vld [vmem:[%s3 + $0x40] sm:$0xff]
    %v130 = vld [vmem:[%s3 + $0x48] sm:$0xff]
    %v131 = vld [vmem:[%s3 + $0x50] sm:$0xff]
    %v132 = vld [vmem:[%s3 + $0x58] sm:$0xff]
    %v133 = vld [vmem:[%s3 + $0x60] sm:$0xf]
    %v134 = vld [vmem:[%s4] sm:$0x1]
    %v136 = vlaneseq
    %v137 = vshrl.u32 %v136, 7
    %v138 = vsub.s32 0, %v137
    %v139 = vrot.slane %v134, %v138
    %v142 = vsel %vm42, %v120, 0
    %v145 = vsel %vm46, %v133, 0
    %147 = vmatprep.subr.mxu0 0.0
    %148 = vmatpush1.msra.mxu0 %v121
    %149 = vmatprep.subr.mxu0 0.0
    %150 = vmatpush1.msra.mxu0 %v122
    %151 = vmatprep.subr.mxu0 0.0
    %152 = vmatpush1.msra.mxu0 %v123
    %153 = vmatprep.subr.mxu0 0.0
    %154 = vmatpush1.msra.mxu0 %v124
    %155 = vmatprep.subr.mxu0 0.0
    %156 = vmatpush1.msra.mxu0 %v125
    %157 = vmatprep.subr.mxu0 0.0
    %158 = vmatpush1.msra.mxu0 %v126
    %159 = vmatprep.subr.mxu0 0.0
    %160 = vmatpush1.msra.mxu0 %v127
    %161 = vmatprep.subr.mxu0 0.0
    %162 = vmatpush1.msra.mxu0 %v128
    %163 = vmatprep.subr.mxu0 0.0
    %164 = vmatpush1.msra.mxu0 %v129
    %165 = vmatprep.subr.mxu0 0.0
    %166 = vmatpush1.msra.mxu0 %v130
    %167 = vmatprep.subr.mxu0 0.0
    %168 = vmatpush1.msra.mxu0 %v131
    %169 = vmatprep.subr.mxu0 0.0
    %170 = vmatpush1.msra.mxu0 %v132
    %171 = vmatprep.subr.mxu0 0.0
    %172 = vmatpush1.msra.mxu0 %v145
    %173 = vmatprep.subr.mxu0 0.0
    %174 = vmatpush1.msra.mxu0 0.0
    %175 = vmatprep.subr.mxu0 0.0
    %176 = vmatpush1.msra.mxu0 0.0
    %177 = vmatprep.subr.mxu0 0.0
    %178 = vmatpush1.msra.mxu0 0.0
    %179 = vmatprep.subr.mxu0 0.0
    %180 = vmatpush1.msra.mxu0 0.0
    %181 = vmatprep.subr.mxu0 0.0
    %182 = vmatpush1.msra.mxu0 0.0
    %183 = vmatprep.subr.mxu0 0.0
    %184 = vmatpush1.msra.mxu0 0.0
    %185 = vmatprep.subr.mxu0 0.0
    %186 = vmatpush1.msra.mxu0 0.0
    %187 = vmatprep.subr.mxu0 0.0
    %188 = vmatpush1.msra.mxu0 0.0
    %189 = vmatprep.subr.mxu0 0.0
    %190 = vmatpush1.msra.mxu0 0.0
    %191 = vmatprep.subr.mxu0 0.0
    %192 = vmatpush1.msra.mxu0 0.0
    %193 = vmatprep.subr.mxu0 0.0
    %194 = vmatpush1.msra.mxu0 0.0
    %195 = vmatprep.subr.mxu0 0.0
    %196 = vmatpush1.msra.mxu0 0.0
    %197 = vmatprep.subr.mxu0 0.0
    %198 = vmatpush1.msra.mxu0 0.0
    %199 = vmatprep.subr.mxu0 0.0
    %200 = vmatpush1.msra.mxu0 0.0
    %201 = vmatprep.subr.mxu0 0.0
    %202 = vmatpush1.msra.mxu0 0.0
    %203 = vmatprep.subr.mxu0 0.0
    %204 = vmatpush1.msra.mxu0 0.0
    %205 = vmatprep.subr.mxu0 0.0
    %206 = vmatpush1.msra.mxu0 0.0
    %207 = vmatprep.subr.mxu0 0.0
    %208 = vmatpush1.msra.mxu0 0.0
    %209 = vmatprep.subr.mxu0 0.0
    %210 = vmatpush1.msra.mxu0 0.0
    %211 = vmatprep.mubr.f32.mxu0 0.0
    %212 = vmatmul.mubr.f32.gmra.mrb[0].mxu0 %v142
    %v213 = vpop.f32.mrb[0].mxu0
    %v214 = vadd.f32 %v139, %v213
    %v215 = vpop.f32.mrb[0].mxu0
    %216 = vdwg.mxu0
    %vm217 = vcmask 80896
    %218 = vst.msk [vmem:[#allocation2] sm:$0xff] %vm217, %v214
    // Predicated region
    $region22: #{simple_module_forward.1} parent=1 // pred_check
      _
    $region23: #{simple_module_forward.1} parent=1 // pred_check_branch
      %220 = sbr.rel (0) target = $region25
    $region24: #{simple_module_forward.1} parent=1 // pred_region
      %s222 = ssub.s32 128, 128
      %223 = vsyncadd [#allocation3], %s222
      %s225 = sshll.u32 [#allocation2], 4
      %s226 = int_to_ptr.vmem [resolvable:$true] %s225
      %228 = dma.vmem_to_hbm [thread:$0]  %s226, 128, %s5, [#allocation3]
    $region25: #{simple_module_forward.1} parent=1 // pred_fallthru
      _
    // Predicated region
    $region26: #{simple_module_forward.1} parent=1 // pred_check
      _
    $region27: #{simple_module_forward.1} parent=1 // pred_check_branch
      %230 = sbr.rel (0) target = $region29
    $region28: #{simple_module_forward.1} parent=1 // pred_region
      %231 = dma.done [#allocation3], 128
    $region29: #{simple_module_forward.1} parent=1 // pred_fallthru
      _
    %232 = vsyncpa [#allocation3], 1

</llo_original>
